<compile_context>
chip_gen: v5e
topology: v5e:2x2
jax: 0.10.0
libtpu: 0.0.40
codegen_flags: <defaults>
</compile_context>

<pallas_src>
import functools

import jax
import jax.numpy as jnp
import numpy as np
from jax import lax
from jax.experimental import pallas as pl
from jax.experimental.pallas import tpu as pltpu


OUT_LANES = 128  # lane-dense packed output width


# ------------------------------ small helpers --------------------------------
def _round_up(v, m):
    return (v + m - 1) // m * m


def _pad_axis(a, axis, size):
    pad = size - a.shape[axis]
    if pad <= 0:
        return a
    widths = [(0, 0)] * a.ndim
    widths[axis] = (0, pad)
    return jnp.pad(a, widths)


def _pick_batch_block(batch, k_rows, *, target_rows=512, min_blocks=2):
    """Largest divisor TB of `batch` with TB*k_rows <= target_rows, preferring
    batch//TB >= min_blocks so the grid can split across TensorCores (v7x)."""
    divisors = [d for d in range(1, batch + 1) if batch % d == 0]
    ok = [d for d in divisors if d * k_rows <= target_rows] or [1]
    pref = [d for d in ok if batch // d >= min_blocks]
    return max(pref) if pref else max(ok)


# ----------------------------- Pallas kernel --------------------------------
def _rtmpose_kernel(
    feat_ref,      # (TB, C, HW)        bf16 input features (streamed)
    convw_ref,     # (KP, C)            f32 1x1 conv weight (K padded to 8)
    convb_ref,     # (KP, 1)            f32 1x1 conv bias
    mlpw_ref,      # (HW, HIDP)         bf16 (HID padded to 128)
    mlpb_ref,      # (1, HIDP)          f32
    clsw_ref,      # (HIDP, WTOTP)      bf16 fused cls heads (width padded)
    clsb_ref,      # (1, WTOTP)         f32 fused cls bias
    out_ref,       # (TB*KP, 128)       f32 packed output (x, y, score, 0...)
    *,
    inv_split: float,
    wx: int,
    wy: int,
):
    tb, c_in, hw = feat_ref.shape
    k = convw_ref.shape[0]

    # bf16 stream -> f32 for the VPU conv accumulate (no bf16 VALU on v5e).
    feat = feat_ref[...].astype(jnp.float32)        # (TB, C, HW)
    convw = convw_ref[...]                          # (KP, C) f32
    convb = convb_ref[...]                          # (KP, 1) f32

    # 1x1 conv over channels, vectorized over the whole batch block:
    # C unrolled broadcast-FMAs producing (TB, KP, HW), then a layout-free
    # leading-dim merge (KP % 8 == 0) to the (TB*KP, HW) MXU LHS.
    acc = convw[:, 0:1].reshape(1, k, 1) * feat[:, 0:1, :]
    for c in range(1, c_in):
        acc = acc + convw[:, c:c + 1].reshape(1, k, 1) * feat[:, c:c + 1, :]
    acc = acc + convb.reshape(1, k, 1)
    kfeat = acc.reshape(tb * k, hw).astype(jnp.bfloat16)      # (M, HW)

    # FC to hidden + SiLU: bf16 MXU matmul, f32 accumulation / activation.
    h = jnp.dot(kfeat, mlpw_ref[...],
                preferred_element_type=jnp.float32) + mlpb_ref[...]
    h = h * jax.nn.sigmoid(h)                                 # SiLU (EUP exp)
    h = h.astype(jnp.bfloat16)

    # Fused SimCC classification heads: one (M, HIDP) @ (HIDP, WTOTP) GEMM.
    s = jnp.dot(h, clsw_ref[...],
                preferred_element_type=jnp.float32) + clsb_ref[...]

    # Decode (torch.max over the SimCC axis) on the fused tile.  Padded lanes
    # (lane >= wx + wy) are excluded from both halves.
    lane = lax.broadcasted_iota(jnp.int32, s.shape, 1)        # (M, WTOTP)
    is_x = lane < wx
    is_y = jnp.logical_and(lane >= wx, lane < wx + wy)
    mx = jnp.max(jnp.where(is_x, s, -jnp.inf), axis=1, keepdims=True)   # (M,1)
    my = jnp.max(jnp.where(is_y, s, -jnp.inf), axis=1, keepdims=True)   # (M,1)
    big = jnp.int32(wx + wy)
    x_locs = jnp.min(jnp.where(is_x & (s == mx), lane, big),
                     axis=1, keepdims=True)                   # first argmax (x)
    y_locs = jnp.min(jnp.where(is_y & (s == my), lane - wx, big),
                     axis=1, keepdims=True)                   # first argmax (y)

    kp_x = x_locs.astype(jnp.float32) * inv_split             # (M, 1)
    kp_y = y_locs.astype(jnp.float32) * inv_split             # (M, 1)
    sc = jnp.maximum(mx, my)                                  # (M, 1)

    # Lane-dense packed store: lane 0 = x, lane 1 = y, lane 2 = score.
    out_lane = lax.broadcasted_iota(jnp.int32, out_ref.shape, 1)   # (M, 128)
    out_ref[...] = jnp.where(
        out_lane == 0, kp_x,
        jnp.where(out_lane == 1, kp_y,
                  jnp.where(out_lane == 2, sc, 0.0)))


# ------------------------------- wrapper -------------------------------------
def rtmpose_with_decode(x, params, *, simcc_split_ratio=2.0, batch_block=None,
                        target_rows=512):
    """x: (B, C, H, W) float32, NCHW like PyTorch. Returns (keypoints, scores)."""
    B, C, H, W = x.shape
    HW = H * W
    conv_w, conv_b, mlp_w, mlp_b, clsx_w, clsx_b, clsy_w, clsy_b = params
    K = conv_w.shape[0]
    HID = mlp_w.shape[1]
    WX = clsx_w.shape[1]
    WY = clsy_w.shape[1]

    # Padded problem sizes: K -> multiple of 8 (sublane rule), HID -> multiple
    # of 128 (lane-dense GEMM1 N / GEMM2 contraction), fused head width ->
    # multiple of 128 (lane-dense GEMM2 / decode; real hand model is 1024).
    KP = _round_up(K, 8)
    HIDP = _round_up(HID, 128)
    WTOT = WX + WY
    WTOTP = _round_up(WTOT, 128)

    TB = batch_block if batch_block is not None else _pick_batch_block(
        B, KP, target_rows=target_rows)
    assert B % TB == 0, "batch block must divide batch"
    num_blocks = B // TB
    M = TB * KP

    # The only per-step HBM stream: bf16 halves DMA bytes (kfeat is cast to
    # bf16 right after the conv anyway).
    feat = x.reshape(B, C, HW).astype(jnp.bfloat16)

    # Zero-padded parameters (padding does not change the valid outputs).
    conv_w_p = _pad_axis(conv_w.astype(jnp.float32), 0, KP)             # (KP, C)
    conv_b_p = _pad_axis(conv_b.astype(jnp.float32), 0, KP)             # (KP, 1)
    mlp_w_p = _pad_axis(mlp_w, 1, HIDP).astype(jnp.bfloat16)            # (HW, HIDP)
    mlp_b_p = _pad_axis(mlp_b.astype(jnp.float32), 1, HIDP)             # (1, HIDP)
    cls_w = jnp.concatenate([clsx_w, clsy_w], axis=1)                   # (HID, WTOT)
    cls_w = _pad_axis(_pad_axis(cls_w, 0, HIDP), 1, WTOTP).astype(jnp.bfloat16)
    cls_b = jnp.concatenate([clsx_b, clsy_b], axis=1).astype(jnp.float32)
    cls_b = _pad_axis(cls_b, 1, WTOTP)                                  # (1, WTOTP)

    kernel = functools.partial(
        _rtmpose_kernel,
        inv_split=float(1.0 / simcc_split_ratio), wx=WX, wy=WY)

    const = lambda shape: pl.BlockSpec(shape, lambda b: (0,) * len(shape))

    packed = pl.pallas_call(
        kernel,
        out_shape=jax.ShapeDtypeStruct((B * KP, OUT_LANES), jnp.float32),
        grid=(num_blocks,),
        in_specs=[
            pl.BlockSpec((TB, C, HW), lambda b: (b, 0, 0)),
            const((KP, C)),
            const((KP, 1)),
            const((HW, HIDP)),
            const((1, HIDP)),
            const((HIDP, WTOTP)),
            const((1, WTOTP)),
        ],
        out_specs=pl.BlockSpec((M, OUT_LANES), lambda b: (b, 0)),
        compiler_params=pltpu.CompilerParams(
            dimension_semantics=("parallel",)),
    )(feat, conv_w_p, conv_b_p, mlp_w_p, mlp_b_p, cls_w, cls_b)

    packed = packed.reshape(B, KP, OUT_LANES)
    keypoints = packed[:, :K, 0:2]        # (B, K, 2) f32 (padded rows dropped)
    scores = packed[:, :K, 2]             # (B, K)    f32
    return keypoints, scores


# --------------------------- pure-JAX reference ------------------------------
def rtmpose_ref(x, params, *, simcc_split_ratio=2.0):
    """Mirrors the kernel's precision policy: bf16 feature stream, bf16 matmul
    inputs, f32 accumulation / activations / decode."""
    B, C, H, W = x.shape
    conv_w, conv_b, mlp_w, mlp_b, clsx_w, clsx_b, clsy_w, clsy_b = params
    feat = x.reshape(B, C, H * W).astype(jnp.bfloat16).astype(jnp.float32)
    kfeat = jnp.einsum("kc,bcs->bks", conv_w, feat) + conv_b[None]
    kfeat = kfeat.astype(jnp.bfloat16)
    h = jnp.einsum("bks,sh->bkh", kfeat, mlp_w.astype(jnp.bfloat16),
                   preferred_element_type=jnp.float32) + mlp_b[None]
    h = (h * jax.nn.sigmoid(h)).astype(jnp.bfloat16)
    sx = jnp.einsum("bkh,hw->bkw", h, clsx_w.astype(jnp.bfloat16),
                    preferred_element_type=jnp.float32) + clsx_b[None]
    sy = jnp.einsum("bkh,hw->bkw", h, clsy_w.astype(jnp.bfloat16),
                    preferred_element_type=jnp.float32) + clsy_b[None]
    mx, xi = sx.max(-1), sx.argmax(-1)
    my, yi = sy.max(-1), sy.argmax(-1)
    kp = jnp.stack([xi, yi], -1).astype(jnp.float32) / simcc_split_ratio
    sc = jnp.maximum(mx, my)
    return kp, sc


# ---------------------------------- main --------------------------------------
if __name__ == "__main__":
    # Small synthetic shapes consistent with the module's forward.
    B, C, H, W = 2, 4, 16, 16
    K = 8              # keypoints (real RTMPose hand model: 21 -> padded to 24)
    HID = 32           # hidden width of the head (padded to 128 in the wrapper)
    SPLIT = 2.0        # simcc_split_ratio
    WX = int(W * SPLIT)
    WY = int(H * SPLIT)
    HW = H * W

    key = jax.random.PRNGKey(0)
    kx, k1, k2, k3, k4, k5, k6, k7, k8 = jax.random.split(key, 9)

    x = jax.random.normal(kx, (B, C, H, W), dtype=jnp.float32)

    params = (
        0.2 * jax.random.normal(k1, (K, C), dtype=jnp.float32),      # conv_w
        0.1 * jax.random.normal(k2, (K, 1), dtype=jnp.float32),      # conv_b
        0.1 * jax.random.normal(k3, (HW, HID), dtype=jnp.float32),   # mlp_w
        0.1 * jax.random.normal(k4, (1, HID), dtype=jnp.float32),    # mlp_b
        0.2 * jax.random.normal(k5, (HID, WX), dtype=jnp.float32),   # clsx_w
        0.1 * jax.random.normal(k6, (1, WX), dtype=jnp.float32),     # clsx_b
        0.2 * jax.random.normal(k7, (HID, WY), dtype=jnp.float32),   # clsy_w
        0.1 * jax.random.normal(k8, (1, WY), dtype=jnp.float32),     # clsy_b
    )

    kp, sc = rtmpose_with_decode(x, params, simcc_split_ratio=SPLIT)
    jax.block_until_ready((kp, sc))

    kp_ref, sc_ref = rtmpose_ref(x, params, simcc_split_ratio=SPLIT)
    # bf16 matmul inputs (same policy in kernel & reference); f32 accumulation.
    np.testing.assert_allclose(np.asarray(sc), np.asarray(sc_ref),
                               rtol=1e-2, atol=1e-2)
    np.testing.assert_allclose(np.asarray(kp), np.asarray(kp_ref),
                               rtol=0, atol=0.51)  # half-bin tolerance for ties

    assert kp.shape == (B, K, 2) and kp.dtype == jnp.float32
    assert sc.shape == (B, K) and sc.dtype == jnp.float32

    print("KERNEL_OK")
</pallas_src>

<mosaic_0001>
module attributes {stable_mosaic.version = 11 : i64} {
  func.func @_rtmpose_kernel(%arg0: i32, %arg1: memref<1x4x256xbf16, #tpu.memory_space<vmem>>, %arg2: memref<8x4xf32, #tpu.memory_space<vmem>>, %arg3: memref<8x1xf32, #tpu.memory_space<vmem>>, %arg4: memref<256x128xbf16, #tpu.memory_space<vmem>>, %arg5: memref<1x128xf32, #tpu.memory_space<vmem>>, %arg6: memref<128x128xbf16, #tpu.memory_space<vmem>>, %arg7: memref<1x128xf32, #tpu.memory_space<vmem>>, %arg8: memref<8x128xf32, #tpu.memory_space<vmem>>) attributes {dimension_semantics = [#tpu.dimension_semantics<parallel>], iteration_bounds = array<i64: 2>, scalar_prefetch = 0 : i64, scratch_operands = 0 : i64, tpu.core_type = #tpu.core_type<tc>, window_params = [{transform_indices = @transform_0, window_bounds = array<i64: 1, 4, 256>}, {pipeline_mode = #tpu.pipeline_mode<synchronous>, transform_indices = @transform_1, window_bounds = array<i64: 8, 4>}, {pipeline_mode = #tpu.pipeline_mode<synchronous>, transform_indices = @transform_2, window_bounds = array<i64: 8, 1>}, {pipeline_mode = #tpu.pipeline_mode<synchronous>, transform_indices = @transform_3, window_bounds = array<i64: 256, 128>}, {pipeline_mode = #tpu.pipeline_mode<synchronous>, transform_indices = @transform_4, window_bounds = array<i64: 1, 128>}, {pipeline_mode = #tpu.pipeline_mode<synchronous>, transform_indices = @transform_5, window_bounds = array<i64: 128, 128>}, {pipeline_mode = #tpu.pipeline_mode<synchronous>, transform_indices = @transform_6, window_bounds = array<i64: 1, 128>}, {transform_indices = @transform_7, window_bounds = array<i64: 8, 128>}]} {
    %c0 = arith.constant 0 : index
    %c0_0 = arith.constant 0 : index
    %c0_1 = arith.constant 0 : index
    %0 = vector.load %arg1[%c0, %c0_0, %c0_1] : memref<1x4x256xbf16, #tpu.memory_space<vmem>>, vector<1x4x256xbf16>
    %1 = arith.extf %0 : vector<1x4x256xbf16> to vector<1x4x256xf32>
    %c0_2 = arith.constant 0 : index
    %c0_3 = arith.constant 0 : index
    %2 = vector.load %arg2[%c0_2, %c0_3] : memref<8x4xf32, #tpu.memory_space<vmem>>, vector<8x4xf32>
    %c0_4 = arith.constant 0 : index
    %c0_5 = arith.constant 0 : index
    %3 = vector.load %arg3[%c0_4, %c0_5] : memref<8x1xf32, #tpu.memory_space<vmem>>, vector<8x1xf32>
    %4 = vector.extract_strided_slice %2 {offsets = [0, 0], sizes = [8, 1], strides = [1, 1]} : vector<8x4xf32> to vector<8x1xf32>
    %5 = vector.shape_cast %4 : vector<8x1xf32> to vector<1x8x1xf32>
    %6 = vector.extract_strided_slice %1 {offsets = [0, 0, 0], sizes = [1, 1, 256], strides = [1, 1, 1]} : vector<1x4x256xf32> to vector<1x1x256xf32>
    %7 = vector.broadcast %5 : vector<1x8x1xf32> to vector<1x8x256xf32>
    %8 = vector.broadcast %6 : vector<1x1x256xf32> to vector<1x8x256xf32>
    %9 = arith.mulf %7, %8 : vector<1x8x256xf32>
    %10 = vector.extract_strided_slice %2 {offsets = [0, 1], sizes = [8, 1], strides = [1, 1]} : vector<8x4xf32> to vector<8x1xf32>
    %11 = vector.shape_cast %10 : vector<8x1xf32> to vector<1x8x1xf32>
    %12 = vector.extract_strided_slice %1 {offsets = [0, 1, 0], sizes = [1, 1, 256], strides = [1, 1, 1]} : vector<1x4x256xf32> to vector<1x1x256xf32>
    %13 = vector.broadcast %11 : vector<1x8x1xf32> to vector<1x8x256xf32>
    %14 = vector.broadcast %12 : vector<1x1x256xf32> to vector<1x8x256xf32>
    %15 = arith.mulf %13, %14 : vector<1x8x256xf32>
    %16 = arith.addf %9, %15 : vector<1x8x256xf32>
    %17 = vector.extract_strided_slice %2 {offsets = [0, 2], sizes = [8, 1], strides = [1, 1]} : vector<8x4xf32> to vector<8x1xf32>
    %18 = vector.shape_cast %17 : vector<8x1xf32> to vector<1x8x1xf32>
    %19 = vector.extract_strided_slice %1 {offsets = [0, 2, 0], sizes = [1, 1, 256], strides = [1, 1, 1]} : vector<1x4x256xf32> to vector<1x1x256xf32>
    %20 = vector.broadcast %18 : vector<1x8x1xf32> to vector<1x8x256xf32>
    %21 = vector.broadcast %19 : vector<1x1x256xf32> to vector<1x8x256xf32>
    %22 = arith.mulf %20, %21 : vector<1x8x256xf32>
    %23 = arith.addf %16, %22 : vector<1x8x256xf32>
    %24 = vector.extract_strided_slice %2 {offsets = [0, 3], sizes = [8, 1], strides = [1, 1]} : vector<8x4xf32> to vector<8x1xf32>
    %25 = vector.shape_cast %24 : vector<8x1xf32> to vector<1x8x1xf32>
    %26 = vector.extract_strided_slice %1 {offsets = [0, 3, 0], sizes = [1, 1, 256], strides = [1, 1, 1]} : vector<1x4x256xf32> to vector<1x1x256xf32>
    %27 = vector.broadcast %25 : vector<1x8x1xf32> to vector<1x8x256xf32>
    %28 = vector.broadcast %26 : vector<1x1x256xf32> to vector<1x8x256xf32>
    %29 = arith.mulf %27, %28 : vector<1x8x256xf32>
    %30 = arith.addf %23, %29 : vector<1x8x256xf32>
    %31 = vector.shape_cast %3 : vector<8x1xf32> to vector<1x8x1xf32>
    %32 = vector.broadcast %31 : vector<1x8x1xf32> to vector<1x8x256xf32>
    %33 = arith.addf %30, %32 : vector<1x8x256xf32>
    %34 = vector.shape_cast %33 : vector<1x8x256xf32> to vector<8x256xf32>
    %35 = arith.truncf %34 : vector<8x256xf32> to vector<8x256xbf16>
    %c0_6 = arith.constant 0 : index
    %c0_7 = arith.constant 0 : index
    %36 = vector.load %arg4[%c0_6, %c0_7] : memref<256x128xbf16, #tpu.memory_space<vmem>>, vector<256x128xbf16>
    %cst = arith.constant dense<0.000000e+00> : vector<8x128xf32>
    %37 = tpu.matmul %35, %36, %cst {dimension_numbers = #tpu.dot_dimension_numbers<[1], [0], [0], [1], [0, 0, 1, 1], [], []>} : vector<8x256xbf16>, vector<256x128xbf16>, vector<8x128xf32> -> vector<8x128xf32>
    %c0_8 = arith.constant 0 : index
    %c0_9 = arith.constant 0 : index
    %38 = vector.load %arg5[%c0_8, %c0_9] : memref<1x128xf32, #tpu.memory_space<vmem>>, vector<1x128xf32>
    %39 = vector.broadcast %38 : vector<1x128xf32> to vector<8x128xf32>
    %40 = arith.addf %37, %39 : vector<8x128xf32>
    %41 = arith.negf %40 : vector<8x128xf32>
    %42 = math.exp %41 : vector<8x128xf32>
    %cst_10 = arith.constant 1.000000e+00 : f32
    %43 = vector.broadcast %cst_10 : f32 to vector<8x128xf32>
    %44 = arith.addf %43, %42 : vector<8x128xf32>
    %45 = arith.divf %43, %44 : vector<8x128xf32>
    %46 = arith.mulf %40, %45 : vector<8x128xf32>
    %47 = arith.truncf %46 : vector<8x128xf32> to vector<8x128xbf16>
    %c0_11 = arith.constant 0 : index
    %c0_12 = arith.constant 0 : index
    %48 = vector.load %arg6[%c0_11, %c0_12] : memref<128x128xbf16, #tpu.memory_space<vmem>>, vector<128x128xbf16>
    %cst_13 = arith.constant dense<0.000000e+00> : vector<8x128xf32>
    %49 = tpu.matmul %47, %48, %cst_13 {dimension_numbers = #tpu.dot_dimension_numbers<[1], [0], [0], [1], [0, 0, 1, 1], [], []>} : vector<8x128xbf16>, vector<128x128xbf16>, vector<8x128xf32> -> vector<8x128xf32>
    %c0_14 = arith.constant 0 : index
    %c0_15 = arith.constant 0 : index
    %50 = vector.load %arg7[%c0_14, %c0_15] : memref<1x128xf32, #tpu.memory_space<vmem>>, vector<1x128xf32>
    %51 = vector.broadcast %50 : vector<1x128xf32> to vector<8x128xf32>
    %52 = arith.addf %49, %51 : vector<8x128xf32>
    %53 = tpu.iota {dimensions = array<i32: 1>} : vector<8x128xi32>
    %c32_i32 = arith.constant 32 : i32
    %54 = vector.broadcast %c32_i32 : i32 to vector<8x128xi32>
    %55 = arith.cmpi slt, %53, %54 : vector<8x128xi32>
    %c32_i32_16 = arith.constant 32 : i32
    %56 = vector.broadcast %c32_i32_16 : i32 to vector<8x128xi32>
    %57 = arith.cmpi sge, %53, %56 : vector<8x128xi32>
    %c64_i32 = arith.constant 64 : i32
    %58 = vector.broadcast %c64_i32 : i32 to vector<8x128xi32>
    %59 = arith.cmpi slt, %53, %58 : vector<8x128xi32>
    %60 = arith.andi %57, %59 : vector<8x128xi1>
    %cst_17 = arith.constant 0xFF800000 : f32
    %61 = vector.broadcast %cst_17 : f32 to vector<8x128xf32>
    %62 = arith.select %55, %52, %61 : vector<8x128xi1>, vector<8x128xf32>
    %cst_18 = arith.constant dense<0xFF800000> : vector<8xf32>
    %63 = vector.multi_reduction <maximumf>, %62, %cst_18 [1] : vector<8x128xf32> to vector<8xf32>
    %64 = vector.shape_cast %63 : vector<8xf32> to vector<8x1xf32>
    %cst_19 = arith.constant 0xFF800000 : f32
    %65 = vector.broadcast %cst_19 : f32 to vector<8x128xf32>
    %66 = arith.select %60, %52, %65 : vector<8x128xi1>, vector<8x128xf32>
    %cst_20 = arith.constant dense<0xFF800000> : vector<8xf32>
    %67 = vector.multi_reduction <maximumf>, %66, %cst_20 [1] : vector<8x128xf32> to vector<8xf32>
    %68 = vector.shape_cast %67 : vector<8xf32> to vector<8x1xf32>
    %69 = vector.broadcast %64 : vector<8x1xf32> to vector<8x128xf32>
    %70 = arith.cmpf oeq, %52, %69 : vector<8x128xf32>
    %71 = arith.andi %55, %70 : vector<8x128xi1>
    %c64_i32_21 = arith.constant 64 : i32
    %72 = vector.broadcast %c64_i32_21 : i32 to vector<8x128xi32>
    %73 = arith.select %71, %53, %72 : vector<8x128xi1>, vector<8x128xi32>
    %cst_22 = arith.constant dense<2147483647> : vector<8xi32>
    %74 = vector.multi_reduction <minsi>, %73, %cst_22 [1] : vector<8x128xi32> to vector<8xi32>
    %75 = vector.shape_cast %74 : vector<8xi32> to vector<8x1xi32>
    %76 = vector.broadcast %68 : vector<8x1xf32> to vector<8x128xf32>
    %77 = arith.cmpf oeq, %52, %76 : vector<8x128xf32>
    %78 = arith.andi %60, %77 : vector<8x128xi1>
    %c32_i32_23 = arith.constant 32 : i32
    %79 = vector.broadcast %c32_i32_23 : i32 to vector<8x128xi32>
    %80 = arith.subi %53, %79 : vector<8x128xi32>
    %c64_i32_24 = arith.constant 64 : i32
    %81 = vector.broadcast %c64_i32_24 : i32 to vector<8x128xi32>
    %82 = arith.select %78, %80, %81 : vector<8x128xi1>, vector<8x128xi32>
    %cst_25 = arith.constant dense<2147483647> : vector<8xi32>
    %83 = vector.multi_reduction <minsi>, %82, %cst_25 [1] : vector<8x128xi32> to vector<8xi32>
    %84 = vector.shape_cast %83 : vector<8xi32> to vector<8x1xi32>
    %85 = arith.sitofp %75 : vector<8x1xi32> to vector<8x1xf32>
    %cst_26 = arith.constant 5.000000e-01 : f32
    %86 = vector.broadcast %cst_26 : f32 to vector<8x1xf32>
    %87 = arith.mulf %85, %86 : vector<8x1xf32>
    %88 = arith.sitofp %84 : vector<8x1xi32> to vector<8x1xf32>
    %cst_27 = arith.constant 5.000000e-01 : f32
    %89 = vector.broadcast %cst_27 : f32 to vector<8x1xf32>
    %90 = arith.mulf %88, %89 : vector<8x1xf32>
    %91 = arith.maximumf %64, %68 : vector<8x1xf32>
    %92 = tpu.iota {dimensions = array<i32: 1>} : vector<8x128xi32>
    %c0_i32 = arith.constant 0 : i32
    %93 = vector.broadcast %c0_i32 : i32 to vector<8x128xi32>
    %94 = arith.cmpi eq, %92, %93 : vector<8x128xi32>
    %c1_i32 = arith.constant 1 : i32
    %95 = vector.broadcast %c1_i32 : i32 to vector<8x128xi32>
    %96 = arith.cmpi eq, %92, %95 : vector<8x128xi32>
    %c2_i32 = arith.constant 2 : i32
    %97 = vector.broadcast %c2_i32 : i32 to vector<8x128xi32>
    %98 = arith.cmpi eq, %92, %97 : vector<8x128xi32>
    %cst_28 = arith.constant 0.000000e+00 : f32
    %99 = vector.shape_cast %91 : vector<8x1xf32> to vector<8x1xf32>
    %100 = vector.broadcast %99 : vector<8x1xf32> to vector<8x128xf32>
    %101 = vector.broadcast %cst_28 : f32 to vector<8x128xf32>
    %102 = arith.select %98, %100, %101 : vector<8x128xi1>, vector<8x128xf32>
    %103 = vector.shape_cast %90 : vector<8x1xf32> to vector<8x1xf32>
    %104 = vector.broadcast %103 : vector<8x1xf32> to vector<8x128xf32>
    %105 = arith.select %96, %104, %102 : vector<8x128xi1>, vector<8x128xf32>
    %106 = vector.shape_cast %87 : vector<8x1xf32> to vector<8x1xf32>
    %107 = vector.broadcast %106 : vector<8x1xf32> to vector<8x128xf32>
    %108 = arith.select %94, %107, %105 : vector<8x128xi1>, vector<8x128xf32>
    %c0_29 = arith.constant 0 : index
    %c0_30 = arith.constant 0 : index
    %109 = vector.load %arg8[%c0_29, %c0_30] : memref<8x128xf32, #tpu.memory_space<vmem>>, vector<8x128xf32>
    tpu.vector_store %arg8[%c0_29, %c0_30], %108 {strides = array<i32>} : memref<8x128xf32, #tpu.memory_space<vmem>>, vector<8x128xf32>,
    return
  }
  func.func @transform_0(%arg0: i32) -> (i32, i32, i32) {
    %c0_i32 = arith.constant 0 : i32
    %c0_i32_0 = arith.constant 0 : i32
    %c0_i32_1 = arith.constant 0 : i32
    return %arg0, %c0_i32, %c0_i32_0 : i32, i32, i32
  }
  func.func @transform_1(%arg0: i32) -> (i32, i32) {
    %c0_i32 = arith.constant 0 : i32
    %c0_i32_0 = arith.constant 0 : i32
    %c0_i32_1 = arith.constant 0 : i32
    return %c0_i32, %c0_i32_0 : i32, i32
  }
  func.func @transform_2(%arg0: i32) -> (i32, i32) {
    %c0_i32 = arith.constant 0 : i32
    %c0_i32_0 = arith.constant 0 : i32
    %c0_i32_1 = arith.constant 0 : i32
    return %c0_i32, %c0_i32_0 : i32, i32
  }
  func.func @transform_3(%arg0: i32) -> (i32, i32) {
    %c0_i32 = arith.constant 0 : i32
    %c0_i32_0 = arith.constant 0 : i32
    %c0_i32_1 = arith.constant 0 : i32
    return %c0_i32, %c0_i32_0 : i32, i32
  }
  func.func @transform_4(%arg0: i32) -> (i32, i32) {
    %c0_i32 = arith.constant 0 : i32
    %c0_i32_0 = arith.constant 0 : i32
    %c0_i32_1 = arith.constant 0 : i32
    return %c0_i32, %c0_i32_0 : i32, i32
  }
  func.func @transform_5(%arg0: i32) -> (i32, i32) {
    %c0_i32 = arith.constant 0 : i32
    %c0_i32_0 = arith.constant 0 : i32
    %c0_i32_1 = arith.constant 0 : i32
    return %c0_i32, %c0_i32_0 : i32, i32
  }
  func.func @transform_6(%arg0: i32) -> (i32, i32) {
    %c0_i32 = arith.constant 0 : i32
    %c0_i32_0 = arith.constant 0 : i32
    %c0_i32_1 = arith.constant 0 : i32
    return %c0_i32, %c0_i32_0 : i32, i32
  }
  func.func @transform_7(%arg0: i32) -> (i32, i32) {
    %c0_i32 = arith.constant 0 : i32
    %c0_i32_0 = arith.constant 0 : i32
    return %arg0, %c0_i32 : i32, i32
  }
}

</mosaic_0001>

<llo_original>
// kernel: tpu_custom_call.1
$region0: #{tpu_custom_call.1}
  #allocation0 [shape = 'u32[]', space=smem, size = 0x4, offset = 0x4, fixed_abs, tag = 'smem constant byte address 0x4 - core index']
  #allocation1 [shape = 'u32[72,128]{1,0:T(1,128)}', space=vmem, size = 0x9000, scoped, tag = 'internal scratch']
  %s0 = inlined_call_operand.vmem [shape: bf16[2,4,256], index: 0, kind: input, shape index: {}]
  %s1 = inlined_call_operand.vmem [shape: f32[8,4], index: 1, kind: input, shape index: {}]
  %s2 = inlined_call_operand.vmem [shape: f32[8,1], index: 2, kind: input, shape index: {}]
  %s3 = inlined_call_operand.hbm [shape: bf16[256,128], index: 3, kind: input, shape index: {}]
  %s4 = inlined_call_operand.vmem [shape: f32[1,128], index: 4, kind: input, shape index: {}]
  %s5 = inlined_call_operand.hbm [shape: bf16[128,128], index: 5, kind: input, shape index: {}]
  %s6 = inlined_call_operand.vmem [shape: f32[1,128], index: 6, kind: input, shape index: {}]
  %s7 = inlined_call_operand.hbm [shape: f32[16,128], index: 7, kind: output, shape index: {}]
  %s8 = sld [smem:[#allocation0]]
  $region69: #{tpu_custom_call.1} parent=0
    _
  %s10 = ssub.s32 1, %s8
  %s11 = scalar_select 0, %s10, %s8
  $region1: #{tpu_custom_call.1} parent=0
    #allocation2 [shape = 'u8[65536]{0}', space=vmem, size = 0x10000, scoped, tag = 'input window, operand 3, single buffered']
    #allocation3 [shape = 's32[2]{0}', space=sflag, size = 0x8, scoped, tag = 'scoped memory for tpu_custom_call.1']
    #allocation4 [shape = 's32[2]{0}', space=sflag, size = 0x8, scoped, tag = 'scoped memory for tpu_custom_call.1']
    #allocation5 [shape = 'u8[32768]{0}', space=vmem, size = 0x8000, scoped, tag = 'input window, operand 5, single buffered']
    #allocation6 [shape = 's32[1]{0}', space=sflag, size = 0x4, scoped, tag = 'scoped memory for tpu_custom_call.1']
    #allocation7 [shape = 'u8[8192]{0}', space=vmem, size = 0x2000, scoped, tag = 'output window, operand 0']
    %12 = vsyncpa [#allocation3], 0
    %13 = vsyncpa [#allocation6], 0
    %14 = vsyncpa [#allocation4], 0
    %s15 = scalar_lea.sflag [#allocation4], 1
    %16 = vsyncpa %s15, 0
    loop: start=0, step=1, limit=4
    $region2: #{tpu_custom_call.1} parent=1 // loop_pre_header
      _
    $region3: #{tpu_custom_call.1} parent=1 // loop_header
      %s18 = sphi 0, %s22
      %p19 = scmp.ge.s32.totalorder %s18, 4
      %s28 = sphi 0, %s30
      %s31 = sphi 0, %s28
      %s32 = sphi 0, %s31
      %s48 = sphi 0, %s32
      %s52 = sphi 0, %s52
      %s54 = sphi 0, %s52
      %s55 = sphi 0, %s54
      %s69 = sphi 0, %s55
      %s73 = sphi 0, %s73
      %s75 = sphi 0, %s73
      %s76 = sphi 0, %s75
      %s90 = sphi 0, %s76
      %s94 = sphi 0, %s94
      %s96 = sphi 0, %s94
      %s97 = sphi 0, %s96
      %s111 = sphi 0, %s97
      %s115 = sphi 0, %s115
      %s117 = sphi 0, %s115
      %s118 = sphi 0, %s117
      %s132 = sphi 0, %s118
      %s136 = sphi 0, %s136
      %s138 = sphi 0, %s136
      %s139 = sphi 0, %s138
      %s153 = sphi 0, %s139
      %s157 = sphi 0, %s157
      %s159 = sphi 0, %s157
      %s160 = sphi 0, %s159
      %s174 = sphi 0, %s160
      %s180 = sphi 0, %s182
      %s183 = sphi 0, %s180
      %s184 = sphi 0, %s183
      %s200 = sphi 0, %s184
    $region4: #{tpu_custom_call.1} parent=1 // loop_header_branch
      %21 = sbr.rel (%p19) target = $region8
    $region5: #{tpu_custom_call.1} parent=1 // loop_body
      %s23 = ssub.s32 %s18, 1
      %s24 = ssub.s32 %s18, 2
      %s25 = sadd.s32 %s18, 1
      %s26 = ssub.s32 %s18, %s25
      %p27 = scmp.eq.s32.totalorder %s26, 0
      %s29 = sadd.s32 %s28, 1
      %s30 = scalar_select %p27, %s28, %s29
      %p33 = pneg %p27
      %p34 = scmp.eq.s32.totalorder %s18, 1
      %p35 = por %p33, %p34
      %p36 = scmp.ne.s32.totalorder %s28, %s31
      %p37 = scmp.eq.s32.totalorder %s18, 0
      %p38 = por %p36, %p37
      %p39 = scmp.ne.s32.totalorder %s28, %s31
      %p40 = scmp.eq.s32.totalorder %s23, 1
      %p41 = por %p39, %p40
      %p42 = scmp.ne.s32.totalorder %s31, %s32
      %p43 = scmp.eq.s32.totalorder %s23, 0
      %p44 = por %p42, %p43
      %p45 = scmp.ne.s32.totalorder %s31, %s32
      %p46 = scmp.eq.s32.totalorder %s24, 1
      %p47 = por %p45, %p46
      %p49 = scmp.ne.s32.totalorder %s32, %s48
      %p50 = scmp.eq.s32.totalorder %s24, 0
      %p51 = por %p49, %p50
      %s53 = sadd.s32 %s52, 1
      %p56 = scmp.eq.s32.totalorder %s18, 1
      %p57 = scmp.ne.s32.totalorder %s52, %s54
      %p58 = scmp.eq.s32.totalorder %s18, 0
      %p59 = por %p57, %p58
      %p60 = scmp.ne.s32.totalorder %s52, %s54
      %p61 = scmp.eq.s32.totalorder %s23, 1
      %p62 = por %p60, %p61
      %p63 = scmp.ne.s32.totalorder %s54, %s55
      %p64 = scmp.eq.s32.totalorder %s23, 0
      %p65 = por %p63, %p64
      %p66 = scmp.ne.s32.totalorder %s54, %s55
      %p67 = scmp.eq.s32.totalorder %s24, 1
      %p68 = por %p66, %p67
      %p70 = scmp.ne.s32.totalorder %s55, %s69
      %p71 = scmp.eq.s32.totalorder %s24, 0
      %p72 = por %p70, %p71
      %s74 = sadd.s32 %s73, 1
      %p77 = scmp.eq.s32.totalorder %s18, 1
      %p78 = scmp.ne.s32.totalorder %s73, %s75
      %p79 = scmp.eq.s32.totalorder %s18, 0
      %p80 = por %p78, %p79
      %p81 = scmp.ne.s32.totalorder %s73, %s75
      %p82 = scmp.eq.s32.totalorder %s23, 1
      %p83 = por %p81, %p82
      %p84 = scmp.ne.s32.totalorder %s75, %s76
      %p85 = scmp.eq.s32.totalorder %s23, 0
      %p86 = por %p84, %p85
      %p87 = scmp.ne.s32.totalorder %s75, %s76
      %p88 = scmp.eq.s32.totalorder %s24, 1
      %p89 = por %p87, %p88
      %p91 = scmp.ne.s32.totalorder %s76, %s90
      %p92 = scmp.eq.s32.totalorder %s24, 0
      %p93 = por %p91, %p92
      %s95 = sadd.s32 %s94, 1
      %p98 = scmp.eq.s32.totalorder %s18, 1
      %p99 = scmp.ne.s32.totalorder %s94, %s96
      %p100 = scmp.eq.s32.totalorder %s18, 0
      %p101 = por %p99, %p100
      %p102 = scmp.ne.s32.totalorder %s94, %s96
      %p103 = scmp.eq.s32.totalorder %s23, 1
      %p104 = por %p102, %p103
      %p105 = scmp.ne.s32.totalorder %s96, %s97
      %p106 = scmp.eq.s32.totalorder %s23, 0
      %p107 = por %p105, %p106
      %p108 = scmp.ne.s32.totalorder %s96, %s97
      %p109 = scmp.eq.s32.totalorder %s24, 1
      %p110 = por %p108, %p109
      %p112 = scmp.ne.s32.totalorder %s97, %s111
      %p113 = scmp.eq.s32.totalorder %s24, 0
      %p114 = por %p112, %p113
      %s116 = sadd.s32 %s115, 1
      %p119 = scmp.eq.s32.totalorder %s18, 1
      %p120 = scmp.ne.s32.totalorder %s115, %s117
      %p121 = scmp.eq.s32.totalorder %s18, 0
      %p122 = por %p120, %p121
      %p123 = scmp.ne.s32.totalorder %s115, %s117
      %p124 = scmp.eq.s32.totalorder %s23, 1
      %p125 = por %p123, %p124
      %p126 = scmp.ne.s32.totalorder %s117, %s118
      %p127 = scmp.eq.s32.totalorder %s23, 0
      %p128 = por %p126, %p127
      %p129 = scmp.ne.s32.totalorder %s117, %s118
      %p130 = scmp.eq.s32.totalorder %s24, 1
      %p131 = por %p129, %p130
      %p133 = scmp.ne.s32.totalorder %s118, %s132
      %p134 = scmp.eq.s32.totalorder %s24, 0
      %p135 = por %p133, %p134
      %s137 = sadd.s32 %s136, 1
      %p140 = scmp.eq.s32.totalorder %s18, 1
      %p141 = scmp.ne.s32.totalorder %s136, %s138
      %p142 = scmp.eq.s32.totalorder %s18, 0
      %p143 = por %p141, %p142
      %p144 = scmp.ne.s32.totalorder %s136, %s138
      %p145 = scmp.eq.s32.totalorder %s23, 1
      %p146 = por %p144, %p145
      %p147 = scmp.ne.s32.totalorder %s138, %s139
      %p148 = scmp.eq.s32.totalorder %s23, 0
      %p149 = por %p147, %p148
      %p150 = scmp.ne.s32.totalorder %s138, %s139
      %p151 = scmp.eq.s32.totalorder %s24, 1
      %p152 = por %p150, %p151
      %p154 = scmp.ne.s32.totalorder %s139, %s153
      %p155 = scmp.eq.s32.totalorder %s24, 0
      %p156 = por %p154, %p155
      %s158 = sadd.s32 %s157, 1
      %p161 = scmp.eq.s32.totalorder %s18, 1
      %p162 = scmp.ne.s32.totalorder %s157, %s159
      %p163 = scmp.eq.s32.totalorder %s18, 0
      %p164 = por %p162, %p163
      %p165 = scmp.ne.s32.totalorder %s157, %s159
      %p166 = scmp.eq.s32.totalorder %s23, 1
      %p167 = por %p165, %p166
      %p168 = scmp.ne.s32.totalorder %s159, %s160
      %p169 = scmp.eq.s32.totalorder %s23, 0
      %p170 = por %p168, %p169
      %p171 = scmp.ne.s32.totalorder %s159, %s160
      %p172 = scmp.eq.s32.totalorder %s24, 1
      %p173 = por %p171, %p172
      %p175 = scmp.ne.s32.totalorder %s160, %s174
      %p176 = scmp.eq.s32.totalorder %s24, 0
      %p177 = por %p175, %p176
      %s178 = ssub.s32 %s18, %s25
      %p179 = scmp.eq.s32.totalorder %s178, 0
      %s181 = sadd.s32 %s180, 1
      %s182 = scalar_select %p179, %s180, %s181
      %p185 = pneg %p179
      %p186 = scmp.eq.s32.totalorder %s18, 1
      %p187 = por %p185, %p186
      %p188 = scmp.ne.s32.totalorder %s180, %s183
      %p189 = scmp.eq.s32.totalorder %s18, 0
      %p190 = por %p188, %p189
      %p191 = scmp.ne.s32.totalorder %s180, %s183
      %p192 = scmp.eq.s32.totalorder %s23, 1
      %p193 = por %p191, %p192
      %p194 = scmp.ne.s32.totalorder %s183, %s184
      %p195 = scmp.eq.s32.totalorder %s23, 0
      %p196 = por %p194, %p195
      %p197 = scmp.ne.s32.totalorder %s183, %s184
      %p198 = scmp.eq.s32.totalorder %s24, 1
      %p199 = por %p197, %p198
      %p201 = scmp.ne.s32.totalorder %s184, %s200
      %p202 = scmp.eq.s32.totalorder %s24, 0
      %p203 = por %p201, %p202
      %p204 = scmp.le.s32.totalorder 1, %s18
      %p205 = scmp.lt.s32.totalorder %s18, 3
      %p206 = pnand %p204, %p205
      %p207 = pneg %p206
      // Predicated region
      $region9: #{tpu_custom_call.1} parent=5 // pred_check
        _
      $region10: #{tpu_custom_call.1} parent=5 // pred_check_branch
        %209 = sbr.rel (%p206) target = $region12
      $region11: #{tpu_custom_call.1} parent=5 // pred_region
        %s210 = ssub.s32 %s18, 1
        // Predicated region
        $region13: #{tpu_custom_call.1} parent=11 // pred_check
          %p211 = pneg %p65
        $region14: #{tpu_custom_call.1} parent=11 // pred_check_branch
          %213 = sbr.rel (%p211) target = $region16
        $region15: #{tpu_custom_call.1} parent=11 // pred_region
          _
        $region16: #{tpu_custom_call.1} parent=11 // pred_fallthru
          _
        // Predicated region
        $region17: #{tpu_custom_call.1} parent=11 // pred_check
          %p214 = pneg %p86
        $region18: #{tpu_custom_call.1} parent=11 // pred_check_branch
          %216 = sbr.rel (%p214) target = $region20
        $region19: #{tpu_custom_call.1} parent=11 // pred_region
          _
        $region20: #{tpu_custom_call.1} parent=11 // pred_fallthru
          _
        // Predicated region
        $region21: #{tpu_custom_call.1} parent=11 // pred_check
          %p217 = pneg %p107
        $region22: #{tpu_custom_call.1} parent=11 // pred_check_branch
          %219 = sbr.rel (%p217) target = $region24
        $region23: #{tpu_custom_call.1} parent=11 // pred_region
          %221 = vsyncadd [#allocation3], 0
          %s222 = sshll.u32 %s3, 4
          %s223 = int_to_ptr.hbm [resolvable:$true] %s222
          %s224 = sshll.u32 [#allocation2], 4
          %s225 = int_to_ptr.vmem [resolvable:$true] %s224
          %230 = dma.hbm_to_vmem [thread:$0]  %s223, 2048, %s225, [#allocation3], 64, 64, 4
        $region24: #{tpu_custom_call.1} parent=11 // pred_fallthru
          _
        // Predicated region
        $region25: #{tpu_custom_call.1} parent=11 // pred_check
          %p231 = pneg %p128
        $region26: #{tpu_custom_call.1} parent=11 // pred_check_branch
          %233 = sbr.rel (%p231) target = $region28
        $region27: #{tpu_custom_call.1} parent=11 // pred_region
          _
        $region28: #{tpu_custom_call.1} parent=11 // pred_fallthru
          _
        // Predicated region
        $region29: #{tpu_custom_call.1} parent=11 // pred_check
          %p234 = pneg %p149
        $region30: #{tpu_custom_call.1} parent=11 // pred_check_branch
          %236 = sbr.rel (%p234) target = $region32
        $region31: #{tpu_custom_call.1} parent=11 // pred_region
          %238 = vsyncadd [#allocation6], 0
          %s239 = sshll.u32 %s5, 4
          %s240 = int_to_ptr.hbm [resolvable:$true] %s239
          %s241 = sshll.u32 [#allocation5], 4
          %s242 = int_to_ptr.vmem [resolvable:$true] %s241
          %247 = dma.hbm_to_vmem [thread:$0]  %s240, 1024, %s242, [#allocation6], 64, 64, 4
        $region32: #{tpu_custom_call.1} parent=11 // pred_fallthru
          _
        // Predicated region
        $region33: #{tpu_custom_call.1} parent=11 // pred_check
          %p248 = pneg %p170
        $region34: #{tpu_custom_call.1} parent=11 // pred_check_branch
          %250 = sbr.rel (%p248) target = $region36
        $region35: #{tpu_custom_call.1} parent=11 // pred_region
          _
        $region36: #{tpu_custom_call.1} parent=11 // pred_fallthru
          _
      $region12: #{tpu_custom_call.1} parent=5 // pred_fallthru
        _
      %p251 = scmp.lt.s32.totalorder %s18, 2
      // Predicated region
      $region37: #{tpu_custom_call.1} parent=5 // pred_check
        %p252 = pneg %p251
      $region38: #{tpu_custom_call.1} parent=5 // pred_check_branch
        %254 = sbr.rel (%p252) target = $region40
      $region39: #{tpu_custom_call.1} parent=5 // pred_region
        // Predicated region
        $region41: #{tpu_custom_call.1} parent=39 // pred_check
          %p255 = pneg %p38
        $region42: #{tpu_custom_call.1} parent=39 // pred_check_branch
          %257 = sbr.rel (%p255) target = $region44
        $region43: #{tpu_custom_call.1} parent=39 // pred_region
          %p258 = scmp.lt.s32.totalorder %s18, 1
          %s259 = scalar_select %p258, %s18, 1
          %s260 = smul.addr %s259, 2
          %s261 = smul.addr %s260, 2
          %s262 = scalar_lea.vmem %s0, %s261
        $region44: #{tpu_custom_call.1} parent=39 // pred_fallthru
          _
      $region40: #{tpu_custom_call.1} parent=5 // pred_fallthru
        _
      %p263 = scmp.le.s32.totalorder 1, %s18
      %p264 = scmp.lt.s32.totalorder %s18, 3
      %p265 = pnand %p263, %p264
      %p266 = pneg %p265
      // Predicated region
      $region45: #{tpu_custom_call.1} parent=5 // pred_check
        _
      $region46: #{tpu_custom_call.1} parent=5 // pred_check_branch
        %268 = sbr.rel (%p265) target = $region48
      $region47: #{tpu_custom_call.1} parent=5 // pred_region
        %s269 = ssub.s32 %s18, 1
        // Predicated region
        $region49: #{tpu_custom_call.1} parent=47 // pred_check
          %p270 = pneg %p107
        $region50: #{tpu_custom_call.1} parent=47 // pred_check_branch
          %272 = sbr.rel (%p270) target = $region52
        $region51: #{tpu_custom_call.1} parent=47 // pred_region
          %274 = dma.done [#allocation3], 2048
        $region52: #{tpu_custom_call.1} parent=47 // pred_fallthru
          _
        // Predicated region
        $region53: #{tpu_custom_call.1} parent=47 // pred_check
          %p275 = pneg %p149
        $region54: #{tpu_custom_call.1} parent=47 // pred_check_branch
          %277 = sbr.rel (%p275) target = $region56
        $region55: #{tpu_custom_call.1} parent=47 // pred_region
          %279 = dma.done [#allocation6], 1024
        $region56: #{tpu_custom_call.1} parent=47 // pred_fallthru
          _
        %p280 = scmp.lt.s32.totalorder %s23, 1
        %s281 = scalar_select %p280, %s23, 1
        %s282 = smul.addr %s281, 2
        %s283 = smul.addr %s282, 2
        %s284 = scalar_lea.vmem %s0, %s283
        %p285 = pneg %p44
        %p286 = pneg %p41
        %p287 = pneg %p65
        %p288 = pneg %p62
        %p289 = pneg %p86
        %p290 = pneg %p83
        %p291 = pneg %p107
        %p292 = pneg %p104
        %p293 = pneg %p128
        %p294 = pneg %p125
        %p295 = pneg %p149
        %p296 = pneg %p146
        %p297 = pneg %p170
        %p298 = pneg %p167
        %p299 = pneg %p196
        %p300 = pneg %p193
        %s301 = sand.u32 %s183, 1
        %s302 = scalar_lea.sflag [#allocation4], %s301
        %s303 = sand.u32 %s183, 1
        %s304 = smul.addr %s303, 8
        %s305 = scalar_lea.vmem [#allocation7], %s304
        %p306 = scmp.lt.s32.totalorder %s23, 1
        %s307 = scalar_select %p306, %s23, 1
        %s308 = smul.addr %s307, 2
        %s309 = smul.addr %s308, 2
        %s310 = scalar_lea.vmem %s0, %s309
        %v311 = vld [vmem:[%s310] sm:$0xf]
        %v312 = vunpack.c.l.bf16 %v311
        %v313 = vld [vmem:[%s1] sm:$0xff]
        %v314 = vld [vmem:[%s2] sm:$0xff]
        %316 = vset.pattern.permute.xlu0 0
        %317 = vperm.xlu0 %316, %v313
        %v318 = vpop.permute.xlu0 %317
        %v321 = vperm.slane %v312, 0
        %v322 = vperm.slane %v312, 4
        %v325 = vperm.slane %v321, 0
        %v326 = vperm.slane %v322, 0
        %v327 = vmul.f32 %v318, %v325
        %v328 = vmul.f32 %v318, %v326
        %329 = vset.pattern.permute.xlu0 1
        %330 = vperm.xlu0 %329, %v313
        %v331 = vpop.permute.xlu0 %330
        %v333 = vperm.slane %v312, 1
        %v334 = vperm.slane %v312, 5
        %v337 = vperm.slane %v333, 1
        %v338 = vperm.slane %v334, 1
        %v339 = vmul.f32 %v331, %v337
        %v340 = vmul.f32 %v331, %v338
        %v341 = vadd.f32 %v327, %v339
        %v342 = vadd.f32 %v328, %v340
        %343 = vset.pattern.permute.xlu0 2
        %344 = vperm.xlu0 %343, %v313
        %v345 = vpop.permute.xlu0 %344
        %v347 = vperm.slane %v312, 2
        %v348 = vperm.slane %v312, 6
        %v351 = vperm.slane %v347, 2
        %v352 = vperm.slane %v348, 2
        %v353 = vmul.f32 %v345, %v351
        %v354 = vmul.f32 %v345, %v352
        %v355 = vadd.f32 %v341, %v353
        %v356 = vadd.f32 %v342, %v354
        %357 = vset.pattern.permute.xlu0 3
        %358 = vperm.xlu0 %357, %v313
        %v359 = vpop.permute.xlu0 %358
        %v361 = vperm.slane %v312, 3
        %v362 = vperm.slane %v312, 7
        %v365 = vperm.slane %v361, 3
        %v366 = vperm.slane %v362, 3
        %v367 = vmul.f32 %v359, %v365
        %v368 = vmul.f32 %v359, %v366
        %v369 = vadd.f32 %v355, %v367
        %v370 = vadd.f32 %v356, %v368
        %372 = vset.pattern.permute.xlu0 0
        %373 = vperm.xlu0 %372, %v314
        %v374 = vpop.permute.xlu0 %373
        %v376 = vadd.f32 %v369, %v374
        %v377 = vadd.f32 %v370, %v374
        %v378 = vpack.c.bf16 %v376, %v376
        %v379 = vpack.c.bf16 %v377, %v377
        %v380 = vld [vmem:[#allocation2] sm:$0xf]
        %v381 = vld [vmem:[#allocation2 + $0x4] sm:$0xf]
        %v382 = vld [vmem:[#allocation2 + $0x8] sm:$0xf]
        %v383 = vld [vmem:[#allocation2 + $0xc] sm:$0xf]
        %v384 = vld [vmem:[#allocation2 + $0x10] sm:$0xf]
        %v385 = vld [vmem:[#allocation2 + $0x14] sm:$0xf]
        %v386 = vld [vmem:[#allocation2 + $0x18] sm:$0xf]
        %v387 = vld [vmem:[#allocation2 + $0x1c] sm:$0xf]
        %v388 = vld [vmem:[#allocation2 + $0x20] sm:$0xf]
        %v389 = vld [vmem:[#allocation2 + $0x24] sm:$0xf]
        %v390 = vld [vmem:[#allocation2 + $0x28] sm:$0xf]
        %v391 = vld [vmem:[#allocation2 + $0x2c] sm:$0xf]
        %v392 = vld [vmem:[#allocation2 + $0x30] sm:$0xf]
        %v393 = vld [vmem:[#allocation2 + $0x34] sm:$0xf]
        %v394 = vld [vmem:[#allocation2 + $0x38] sm:$0xf]
        %v395 = vld [vmem:[#allocation2 + $0x3c] sm:$0xf]
        %v396 = vld [vmem:[#allocation2 + $0x40] sm:$0xf]
        %v397 = vld [vmem:[#allocation2 + $0x44] sm:$0xf]
        %v398 = vld [vmem:[#allocation2 + $0x48] sm:$0xf]
        %v399 = vld [vmem:[#allocation2 + $0x4c] sm:$0xf]
        %v400 = vld [vmem:[#allocation2 + $0x50] sm:$0xf]
        %v401 = vld [vmem:[#allocation2 + $0x54] sm:$0xf]
        %v402 = vld [vmem:[#allocation2 + $0x58] sm:$0xf]
        %v403 = vld [vmem:[#allocation2 + $0x5c] sm:$0xf]
        %v404 = vld [vmem:[#allocation2 + $0x60] sm:$0xf]
        %v405 = vld [vmem:[#allocation2 + $0x64] sm:$0xf]
        %v406 = vld [vmem:[#allocation2 + $0x68] sm:$0xf]
        %v407 = vld [vmem:[#allocation2 + $0x6c] sm:$0xf]
        %v408 = vld [vmem:[#allocation2 + $0x70] sm:$0xf]
        %v409 = vld [vmem:[#allocation2 + $0x74] sm:$0xf]
        %v410 = vld [vmem:[#allocation2 + $0x78] sm:$0xf]
        %v411 = vld [vmem:[#allocation2 + $0x7c] sm:$0xf]
        %v412 = vld [vmem:[%s4] sm:$0x1]
        %v414 = vperm.slane %v412, 0
        %v448 = vunpack.c.l.b16 %v380
        %v449 = vunpack.c.l.b16 %v381
        %v450 = vunpack.c.l.b16 %v382
        %v451 = vunpack.c.l.b16 %v383
        %v452 = vunpack.c.l.b16 %v384
        %v453 = vunpack.c.l.b16 %v385
        %v454 = vunpack.c.l.b16 %v386
        %v455 = vunpack.c.l.b16 %v387
        %v456 = vunpack.c.l.b16 %v388
        %v457 = vunpack.c.l.b16 %v389
        %v458 = vunpack.c.l.b16 %v390
        %v459 = vunpack.c.l.b16 %v391
        %v460 = vunpack.c.l.b16 %v392
        %v461 = vunpack.c.l.b16 %v393
        %v462 = vunpack.c.l.b16 %v394
        %v463 = vunpack.c.l.b16 %v395
        %v464 = vunpack.c.l.b16 %v396
        %v465 = vunpack.c.l.b16 %v397
        %v466 = vunpack.c.l.b16 %v398
        %v467 = vunpack.c.l.b16 %v399
        %v468 = vunpack.c.l.b16 %v400
        %v469 = vunpack.c.l.b16 %v401
        %v470 = vunpack.c.l.b16 %v402
        %v471 = vunpack.c.l.b16 %v403
        %v472 = vunpack.c.l.b16 %v404
        %v473 = vunpack.c.l.b16 %v405
        %v474 = vunpack.c.l.b16 %v406
        %v475 = vunpack.c.l.b16 %v407
        %v476 = vunpack.c.l.b16 %v408
        %v477 = vunpack.c.l.b16 %v409
        %v478 = vunpack.c.l.b16 %v410
        %v479 = vunpack.c.l.b16 %v411
        %v480 = vpack.c.b16 %v449, %v448
        %v481 = vpack.c.b16 %v451, %v450
        %v482 = vpack.c.b16 %v453, %v452
        %v483 = vpack.c.b16 %v455, %v454
        %v484 = vpack.c.b16 %v457, %v456
        %v485 = vpack.c.b16 %v459, %v458
        %v486 = vpack.c.b16 %v461, %v460
        %v487 = vpack.c.b16 %v463, %v462
        %v488 = vpack.c.b16 %v465, %v464
        %v489 = vpack.c.b16 %v467, %v466
        %v490 = vpack.c.b16 %v469, %v468
        %v491 = vpack.c.b16 %v471, %v470
        %v492 = vpack.c.b16 %v473, %v472
        %v493 = vpack.c.b16 %v475, %v474
        %v494 = vpack.c.b16 %v477, %v476
        %v495 = vpack.c.b16 %v479, %v478
        %512 = vmatpush.bf16.msra.mxu0 %v487
        %513 = vmatpush.bf16.msra.mxu0 %v486
        %514 = vmatpush.bf16.msra.mxu0 %v485
        %515 = vmatpush.bf16.msra.mxu0 %v484
        %516 = vmatpush.bf16.msra.mxu0 %v483
        %517 = vmatpush.bf16.msra.mxu0 %v482
        %518 = vmatpush.bf16.msra.mxu0 %v481
        %519 = vmatpush.bf16.msra.mxu0 %v480
        %520 = vmatmul.bf16.gmra.mxu0 %v378
        %v521 = vpop.f32.mrf.mxu0
        %v522 = vadd.f32 %v414, %v521
        %v523 = vpop.f32.mrf.mxu0
        %524 = vdwg.mxu0
        %525 = vmatpush.bf16.msra.mxu0 %v495
        %526 = vmatpush.bf16.msra.mxu0 %v494
        %527 = vmatpush.bf16.msra.mxu0 %v493
        %528 = vmatpush.bf16.msra.mxu0 %v492
        %529 = vmatpush.bf16.msra.mxu0 %v491
        %530 = vmatpush.bf16.msra.mxu0 %v490
        %531 = vmatpush.bf16.msra.mxu0 %v489
        %532 = vmatpush.bf16.msra.mxu0 %v488
        %533 = vmatmul.bf16.gmra.mxu0 %v379
        %v534 = vpop.f32.mrf.mxu0
        %v535 = vadd.f32 %v522, %v534
        %v536 = vpop.f32.mrf.mxu0
        %537 = vdwg.mxu0
        %v538 = vxor.u32 %v535, 2147483648
        %v539 = vmul.f32 %v538, 1.442695
        %v540 = vpow.pop %v539
        %v541 = vadd.f32 %v540, 1.0
        %v542 = vrcp.pop %v541
        %v543 = vmul.f32 %v541, %v542
        %v544 = vsub.f32 1.0, %v543
        %v545 = vmul.f32 %v542, %v544
        %v546 = vadd.f32 %v542, %v545
        %vm547 = vweird.f32 %v541
        %vm548 = vweird.f32 %v542
        %vm549 = vmor %vm547, %vm548
        %v550 = vsel %vm549, %v542, %v546
        %v551 = vand.u32 2147483647, %v541
        %vm552 = vcmp.eq.f32.partialorder %v551, 8.507059e+37
        %v553 = vand.u32 %v541, 2147483648
        %v554 = vor.u32 1.1754944e-38, %v553
        %v555 = vsel %vm552, %v554, %v550
        %v556 = vmul.f32 1.0, %v555
        %v557 = vmul.f32 %v535, %v556
        %v558 = vpack.c.bf16 %v557, %v557
        %v559 = vld [vmem:[#allocation5] sm:$0xf]
        %v560 = vld [vmem:[#allocation5 + $0x4] sm:$0xf]
        %v561 = vld [vmem:[#allocation5 + $0x8] sm:$0xf]
        %v562 = vld [vmem:[#allocation5 + $0xc] sm:$0xf]
        %v563 = vld [vmem:[#allocation5 + $0x10] sm:$0xf]
        %v564 = vld [vmem:[#allocation5 + $0x14] sm:$0xf]
        %v565 = vld [vmem:[#allocation5 + $0x18] sm:$0xf]
        %v566 = vld [vmem:[#allocation5 + $0x1c] sm:$0xf]
        %v567 = vld [vmem:[#allocation5 + $0x20] sm:$0xf]
        %v568 = vld [vmem:[#allocation5 + $0x24] sm:$0xf]
        %v569 = vld [vmem:[#allocation5 + $0x28] sm:$0xf]
        %v570 = vld [vmem:[#allocation5 + $0x2c] sm:$0xf]
        %v571 = vld [vmem:[#allocation5 + $0x30] sm:$0xf]
        %v572 = vld [vmem:[#allocation5 + $0x34] sm:$0xf]
        %v573 = vld [vmem:[#allocation5 + $0x38] sm:$0xf]
        %v574 = vld [vmem:[#allocation5 + $0x3c] sm:$0xf]
        %v575 = vld [vmem:[%s6] sm:$0x1]
        %v577 = vperm.slane %v575, 0
        %v595 = vunpack.c.l.b16 %v559
        %v596 = vunpack.c.l.b16 %v560
        %v597 = vunpack.c.l.b16 %v561
        %v598 = vunpack.c.l.b16 %v562
        %v599 = vunpack.c.l.b16 %v563
        %v600 = vunpack.c.l.b16 %v564
        %v601 = vunpack.c.l.b16 %v565
        %v602 = vunpack.c.l.b16 %v566
        %v603 = vunpack.c.l.b16 %v567
        %v604 = vunpack.c.l.b16 %v568
        %v605 = vunpack.c.l.b16 %v569
        %v606 = vunpack.c.l.b16 %v570
        %v607 = vunpack.c.l.b16 %v571
        %v608 = vunpack.c.l.b16 %v572
        %v609 = vunpack.c.l.b16 %v573
        %v610 = vunpack.c.l.b16 %v574
        %v611 = vpack.c.b16 %v596, %v595
        %v612 = vpack.c.b16 %v598, %v597
        %v613 = vpack.c.b16 %v600, %v599
        %v614 = vpack.c.b16 %v602, %v601
        %v615 = vpack.c.b16 %v604, %v603
        %v616 = vpack.c.b16 %v606, %v605
        %v617 = vpack.c.b16 %v608, %v607
        %v618 = vpack.c.b16 %v610, %v609
        %627 = vmatpush.bf16.msra.mxu0 %v618
        %628 = vmatpush.bf16.msra.mxu0 %v617
        %629 = vmatpush.bf16.msra.mxu0 %v616
        %630 = vmatpush.bf16.msra.mxu0 %v615
        %631 = vmatpush.bf16.msra.mxu0 %v614
        %632 = vmatpush.bf16.msra.mxu0 %v613
        %633 = vmatpush.bf16.msra.mxu0 %v612
        %634 = vmatpush.bf16.msra.mxu0 %v611
        %635 = vmatmul.bf16.gmra.mxu0 %v558
        %v636 = vpop.f32.mrf.mxu0
        %v637 = vadd.f32 %v577, %v636
        %v638 = vpop.f32.mrf.mxu0
        %639 = vdwg.mxu0
        %v640 = vlaneseq
        %v641 = vand.u32 %v640, 127
        %vm642 = vcmp.lt.s32.totalorder %v641, 32
        %vm643 = vcmp.ge.s32.totalorder %v641, 32
        %vm644 = vcmp.lt.s32.totalorder %v641, 64
        %vm645 = vmand %vm643, %vm644
        %v646 = vsel %vm642, %v637, -inf
        %647 = vmax.xlane.f32.xlu0 %v646
        %v648 = vpop.xlane.xlu0 %647
        %v649 = vsel %vm645, %v637, -inf
        %650 = vmax.xlane.f32.xlu0 %v649
        %v651 = vpop.xlane.xlu0 %650
        %vm652 = vcmp.eq.f32.partialorder %v637, %v648
        %vm653 = vmand %vm642, %vm652
        %v654 = vsel %vm653, %v641, 64
        %v655 = vand.u32 %v654, 65535
        %v656 = vshra.s32 %v654, 16
        %v657 = vcvt.s32.f32 %v655
        %v658 = vcvt.s32.f32 %v656
        %659 = vmin.xlane.f32.xlu0 %v658
        %v660 = vpop.xlane.xlu0 %659
        %vm661 = vcmp.eq.f32.partialorder %v658, %v660
        %v662 = vsel %vm661, %v657, inf
        %663 = vmin.xlane.f32.xlu0 %v662
        %v664 = vpop.xlane.xlu0 %663
        %v665 = vcvt.f32.s32 %v664
        %v666 = vcvt.f32.s32 %v660
        %v667 = vshll.u32 %v666, 16
        %v668 = vadd.s32 %v667, %v665
        %vm669 = vcmp.eq.f32.partialorder %v637, %v651
        %vm670 = vmand %vm645, %vm669
        %v671 = vsub.s32 %v641, 32
        %v672 = vsel %vm670, %v671, 64
        %v673 = vand.u32 %v672, 65535
        %v674 = vshra.s32 %v672, 16
        %v675 = vcvt.s32.f32 %v673
        %v676 = vcvt.s32.f32 %v674
        %677 = vmin.xlane.f32.xlu0 %v676
        %v678 = vpop.xlane.xlu0 %677
        %vm679 = vcmp.eq.f32.partialorder %v676, %v678
        %v680 = vsel %vm679, %v675, inf
        %681 = vmin.xlane.f32.xlu0 %v680
        %v682 = vpop.xlane.xlu0 %681
        %v683 = vcvt.f32.s32 %v682
        %v684 = vcvt.f32.s32 %v678
        %v685 = vshll.u32 %v684, 16
        %v686 = vadd.s32 %v685, %v683
        %v687 = vcvt.s32.f32 %v668
        %v688 = vmul.f32 %v687, 0.5
        %v689 = vcvt.s32.f32 %v686
        %v690 = vmul.f32 %v689, 0.5
        %v691 = vmax.f32 %v648, %v651
        %vm692 = vcmp.eq.s32.totalorder %v641, 0
        %vm693 = vcmp.eq.s32.totalorder %v641, 1
        %vm694 = vcmp.eq.s32.totalorder %v641, 2
        %v695 = vsel %vm694, %v691, 0.0
        %v696 = vsel %vm693, %v690, %v695
        %v697 = vsel %vm692, %v688, %v696
        %698 = vst [vmem:[%s305] sm:$0xff] %v697
        %s699 = sand.u32 %s183, 1
        %s700 = scalar_lea.sflag [#allocation4], %s699
        %s701 = sand.u32 %s183, 1
        %s702 = smul.addr %s701, 8
        %s703 = scalar_lea.vmem [#allocation7], %s702
        // Predicated region
        $region57: #{tpu_custom_call.1} parent=47 // pred_check
          %p704 = pneg %p193
        $region58: #{tpu_custom_call.1} parent=47 // pred_check_branch
          %706 = sbr.rel (%p704) target = $region60
        $region59: #{tpu_custom_call.1} parent=47 // pred_region
          %708 = vsyncadd %s700, 0
          %s709 = smul.addr %s23, 8
          %s710 = scalar_lea.hbm %s7, %s709
          %s712 = sshll.u32 %s703, 4
          %s713 = int_to_ptr.vmem [resolvable:$true] %s712
          %s714 = sshll.u32 %s710, 4
          %s715 = int_to_ptr.hbm [resolvable:$true] %s714
          %717 = dma.vmem_to_hbm [thread:$0]  %s713, 128, %s715, %s700
        $region60: #{tpu_custom_call.1} parent=47 // pred_fallthru
          _
      $region48: #{tpu_custom_call.1} parent=5 // pred_fallthru
        _
      %p718 = scmp.le.s32.totalorder 2, %s18
      // Predicated region
      $region61: #{tpu_custom_call.1} parent=5 // pred_check
        %p719 = pneg %p718
      $region62: #{tpu_custom_call.1} parent=5 // pred_check_branch
        %721 = sbr.rel (%p719) target = $region64
      $region63: #{tpu_custom_call.1} parent=5 // pred_region
        %s722 = ssub.s32 %s18, 2
        // Predicated region
        $region65: #{tpu_custom_call.1} parent=63 // pred_check
          %p723 = pneg %p199
        $region66: #{tpu_custom_call.1} parent=63 // pred_check_branch
          %725 = sbr.rel (%p723) target = $region68
        $region67: #{tpu_custom_call.1} parent=63 // pred_region
          %s726 = sand.u32 %s184, 1
          %s727 = scalar_lea.sflag [#allocation4], %s726
          %s728 = sand.u32 %s184, 1
          %s729 = smul.addr %s728, 8
          %s730 = scalar_lea.vmem [#allocation7], %s729
          %732 = dma.done %s727, 128
        $region68: #{tpu_custom_call.1} parent=63 // pred_fallthru
          _
      $region64: #{tpu_custom_call.1} parent=5 // pred_fallthru
        _
    $region6: #{tpu_custom_call.1} parent=1 // loop_footer
      %s22 = sadd.s32 1, %s18
    $region7: #{tpu_custom_call.1} parent=1 // loop_footer_branch
      %17 = sbr.rel target = $region3
    $region8: #{tpu_custom_call.1} parent=1 // loop_exit
      _
    %733 = vsyncpa [#allocation3], 1
    %s734 = scalar_lea.sflag [#allocation3], 1
    %735 = vsyncpa %s734, 1
    %736 = vsyncpa [#allocation6], 1
    %737 = vsyncpa [#allocation4], 1
    %s738 = scalar_lea.sflag [#allocation4], 1
    %739 = vsyncpa %s738, 1

</llo_original>
